<compile_context>
chip_gen: v6e
topology: v6e:2x2x1
jax: 0.10.0
libtpu: 0.0.40
codegen_flags: <defaults>
</compile_context>

<pallas_src>
import math

import jax
import jax.numpy as jnp
from jax.experimental import pallas as pl
from jax.experimental.pallas import tpu as pltpu

_LANES = 128                 # vreg lane width
_SUBLANES = 8                # f32 sublanes per vreg
_TILE_ROWS = 1024            # rows per grid step at large shapes (512 KiB/operand block)
_SINGLE_BLOCK_MAX_ROWS = 2048  # <= 1 MiB per operand -> keep as one VMEM block


def _sub_kernel(pred_ref, tgt_ref, out_ref):
    # Elementwise difference on a lane-dense (rows, 128) VMEM block (VPU op).
    out_ref[...] = pred_ref[...] - tgt_ref[...]


def sp_loss(predictions: jax.Array, target: jax.Array) -> jax.Array:
    """Pallas equivalent of SPLoss.forward: returns predictions - target."""
    assert predictions.shape == target.shape
    assert predictions.dtype == target.dtype

    orig_shape = predictions.shape
    dtype = predictions.dtype
    n = math.prod(orig_shape) if orig_shape else 1

    # ---- lane-dense packing: flatten -> pad -> (rows, 128) slab ----
    rows = pl.cdiv(n, _LANES)
    if rows <= _SINGLE_BLOCK_MAX_ROWS:
        rows_padded = ((rows + _SUBLANES - 1) // _SUBLANES) * _SUBLANES
        use_grid = False
    else:
        rows_padded = ((rows + _TILE_ROWS - 1) // _TILE_ROWS) * _TILE_ROWS
        use_grid = True
    padded_n = rows_padded * _LANES

    def _pack(x):
        flat = x.reshape(-1)
        if padded_n != n:
            flat = jnp.pad(flat, (0, padded_n - n))
        return flat.reshape(rows_padded, _LANES)

    pred2d = _pack(predictions)
    tgt2d = _pack(target)

    out_shape = jax.ShapeDtypeStruct((rows_padded, _LANES), dtype)

    if not use_grid:
        # Whole tensor is one VMEM-resident block; no grid, no index_map.
        spec = pl.BlockSpec(memory_space=pltpu.MemorySpace.VMEM)
        out2d = pl.pallas_call(
            _sub_kernel,
            out_shape=out_shape,
            in_specs=[spec, spec],
            out_specs=spec,
            input_output_aliases={0: 0},  # reuse predictions slab for the output
        )(pred2d, tgt2d)
    else:
        # Large-shape path: tile rows, shard the grid across TensorCores.
        spec = pl.BlockSpec((_TILE_ROWS, _LANES), lambda i: (i, 0))
        out2d = pl.pallas_call(
            _sub_kernel,
            out_shape=out_shape,
            grid=(rows_padded // _TILE_ROWS,),
            in_specs=[spec, spec],
            out_specs=spec,
            input_output_aliases={0: 0},
            compiler_params=pltpu.CompilerParams(
                dimension_semantics=("parallel",)),
        )(pred2d, tgt2d)

    # Strip the padding and restore the original (N, S, S, D) shape.
    return out2d.reshape(-1)[:n].reshape(orig_shape)


if __name__ == "__main__":
    # Shapes implied by __init__ defaults: S=7 grid cells, B=2 boxes, C=20
    # classes -> per-cell feature dim D = B*5 + C = 30.  Small batch of 2.
    N, S, B, C = 2, 7, 2, 20
    D = B * 5 + C  # 30

    key = jax.random.PRNGKey(0)
    k_pred, k_tgt = jax.random.split(key)
    predictions = jax.random.normal(k_pred, (N, S, S, D), dtype=jnp.float32)
    target = jax.random.normal(k_tgt, (N, S, S, D), dtype=jnp.float32)

    out = sp_loss(predictions, target)
    out = jax.block_until_ready(out)

    # Sanity check against the pure-JAX reference (same semantics as PyTorch).
    ref = predictions - target
    assert out.shape == ref.shape and out.dtype == ref.dtype
    assert jnp.allclose(out, ref, atol=0.0, rtol=0.0)

    print("KERNEL_OK")
</pallas_src>

<mosaic_0001>
module attributes {stable_mosaic.version = 11 : i64} {
  func.func @_sub_kernel(%arg0: memref<24x128xf32, #tpu.memory_space<vmem>>, %arg1: memref<24x128xf32, #tpu.memory_space<vmem>>, %arg2: memref<24x128xf32, #tpu.memory_space<vmem>>) attributes {dimension_semantics = [], scalar_prefetch = 0 : i64, scratch_operands = 0 : i64, tpu.core_type = #tpu.core_type<tc>} {
    %c0 = arith.constant 0 : index
    %c0_0 = arith.constant 0 : index
    %0 = vector.load %arg0[%c0, %c0_0] : memref<24x128xf32, #tpu.memory_space<vmem>>, vector<24x128xf32>
    %c0_1 = arith.constant 0 : index
    %c0_2 = arith.constant 0 : index
    %1 = vector.load %arg1[%c0_1, %c0_2] : memref<24x128xf32, #tpu.memory_space<vmem>>, vector<24x128xf32>
    %2 = arith.subf %0, %1 : vector<24x128xf32>
    %c0_3 = arith.constant 0 : index
    %c0_4 = arith.constant 0 : index
    %3 = vector.load %arg2[%c0_3, %c0_4] : memref<24x128xf32, #tpu.memory_space<vmem>>, vector<24x128xf32>
    tpu.vector_store %arg2[%c0_3, %c0_4], %2 {strides = array<i32>} : memref<24x128xf32, #tpu.memory_space<vmem>>, vector<24x128xf32>,
    return
  }
}

</mosaic_0001>

<llo_original>
// kernel: tpu_custom_call.1
$region0: #{tpu_custom_call.1}
  #allocation0 [shape = 'u32[]', space=smem, size = 0x4, offset = 0x4, fixed_abs, tag = 'smem constant byte address 0x4 - core index']
  #allocation1 [shape = 'u32[144,128]{1,0:T(1,128)}', space=vmem, size = 0x12000, scoped, tag = 'internal scratch']
  %s0 = inlined_call_operand.hbm [shape: f32[24,128], index: 0, kind: input, shape index: {}, may-alias: {0,2}]
  %s1 = inlined_call_operand.vmem [shape: f32[24,128], index: 1, kind: input, shape index: {}]
  %s2 = inlined_call_operand.hbm [shape: f32[24,128], index: 2, kind: output, shape index: {}, may-alias: {0,2}]
  %s3 = sld [smem:[#allocation0]]
  $region22: #{tpu_custom_call.1} parent=0
    _
  %s5 = ssub.s32 1, %s3
  %s6 = scalar_select 0, %s5, %s3
  $region1: #{tpu_custom_call.1} parent=0
    #allocation2 [shape = 'u8[12288]{0}', space=vmem, size = 0x3000, scoped, tag = 'input window, operand 0, single buffered']
    #allocation3 [shape = 's32[1]{0}', space=sflag, size = 0x4, scoped, tag = 'scoped memory for tpu_custom_call.1']
    #allocation4 [shape = 's32[1]{0}', space=sflag, size = 0x4, scoped, tag = 'scoped memory for tpu_custom_call.1']
    #allocation5 [shape = 'u8[12288]{0}', space=vmem, size = 0x3000, scoped, tag = 'output window, operand 0, single buffered']
    %7 = vsyncpa [#allocation3], 0
    %8 = vsyncpa [#allocation4], 0
    // Predicated region
    $region2: #{tpu_custom_call.1} parent=1 // pred_check
      _
    $region3: #{tpu_custom_call.1} parent=1 // pred_check_branch
      %10 = sbr.rel (0) target = $region5
    $region4: #{tpu_custom_call.1} parent=1 // pred_region
      %s12 = ssub.s32 384, 384
      %13 = vsyncadd [#allocation3], %s12
      %s14 = sshll.u32 [#allocation2], 4
      %s15 = int_to_ptr.vmem [resolvable:$true] %s14
      %20 = dma.hbm_to_vmem [thread:$0]  %s0, 384, %s15, [#allocation3], 128, 128, 8
    $region5: #{tpu_custom_call.1} parent=1 // pred_fallthru
      _
    // Predicated region
    $region6: #{tpu_custom_call.1} parent=1 // pred_check
      _
    $region7: #{tpu_custom_call.1} parent=1 // pred_check_branch
      %22 = sbr.rel (0) target = $region9
    $region8: #{tpu_custom_call.1} parent=1 // pred_region
      _
    $region9: #{tpu_custom_call.1} parent=1 // pred_fallthru
      _
    // Predicated region
    $region10: #{tpu_custom_call.1} parent=1 // pred_check
      _
    $region11: #{tpu_custom_call.1} parent=1 // pred_check_branch
      %24 = sbr.rel (0) target = $region13
    $region12: #{tpu_custom_call.1} parent=1 // pred_region
      %25 = dma.done [#allocation3], 384
    $region13: #{tpu_custom_call.1} parent=1 // pred_fallthru
      _
    %v26 = vld [vmem:[#allocation2] sm:$0xff]
    %v27 = vld [vmem:[#allocation2 + $0x8] sm:$0xff]
    %v28 = vld [vmem:[#allocation2 + $0x10] sm:$0xff]
    %v29 = vld [vmem:[%s1] sm:$0xff]
    %v30 = vld [vmem:[%s1 + $0x8] sm:$0xff]
    %v31 = vld [vmem:[%s1 + $0x10] sm:$0xff]
    %v32 = vsub.f32 %v26, %v29
    %v33 = vsub.f32 %v27, %v30
    %v34 = vsub.f32 %v28, %v31
    %35 = vst [vmem:[#allocation5] sm:$0xff] %v32
    %36 = vst [vmem:[#allocation5 + $0x8] sm:$0xff] %v33
    %37 = vst [vmem:[#allocation5 + $0x10] sm:$0xff] %v34
    // Predicated region
    $region14: #{tpu_custom_call.1} parent=1 // pred_check
      _
    $region15: #{tpu_custom_call.1} parent=1 // pred_check_branch
      %39 = sbr.rel (0) target = $region17
    $region16: #{tpu_custom_call.1} parent=1 // pred_region
      %s41 = ssub.s32 384, 384
      %42 = vsyncadd [#allocation4], %s41
      %s43 = sshll.u32 [#allocation5], 4
      %s44 = int_to_ptr.vmem [resolvable:$true] %s43
      %49 = dma.vmem_to_hbm [thread:$0]  %s44, 384, %s2, [#allocation4], 128, 128, 8
    $region17: #{tpu_custom_call.1} parent=1 // pred_fallthru
      _
    // Predicated region
    $region18: #{tpu_custom_call.1} parent=1 // pred_check
      _
    $region19: #{tpu_custom_call.1} parent=1 // pred_check_branch
      %51 = sbr.rel (0) target = $region21
    $region20: #{tpu_custom_call.1} parent=1 // pred_region
      %52 = dma.done [#allocation4], 384
    $region21: #{tpu_custom_call.1} parent=1 // pred_fallthru
      _
    %53 = vsyncpa [#allocation3], 1
    %54 = vsyncpa [#allocation4], 1

</llo_original>
